<compile_context>
chip_gen: v6e
topology: v6e:2x2x1
jax: 0.10.0
libtpu: 0.0.40
codegen_flags: <defaults>
</compile_context>

<pallas_src>
import functools

import jax
import jax.numpy as jnp
from jax import lax
from jax.experimental import pallas as pl
from jax.experimental.pallas import tpu as pltpu

_MIB = 1024 * 1024


def _round_up(n, m):
    return (n + m - 1) // m * m


def _attention2d_kernel(x_ref, w1t_ref, w2t_ref, o_ref, acc_ref, *,
                        hw_total, inv_temp):
    # x_ref:   (b_tile, C, hw_tile)  input activations (any float dtype)
    # w1t_ref: (C, hidden) f32       fc1 weight, pre-transposed
    # w2t_ref: (hidden, K) f32       fc2 weight, pre-transposed
    # o_ref:   (b_tile, 1, K) f32    softmax output (middle dim keeps blocks legal)
    # acc_ref: (b_tile, C, 128) f32  lane-parallel partial spatial sums
    b_tile, C, hw_tile = x_ref.shape
    n_chunks = hw_tile // 128
    needs_mask = (hw_total % hw_tile) != 0          # static python bool
    hw = pl.program_id(1)

    @pl.when(hw == 0)
    def _init():
        acc_ref[...] = jnp.zeros_like(acc_ref)

    def load_chunk(g, start):
        # Per-chunk ref slice keeps vreg pressure at ~one chunk (no tile spill).
        c = x_ref[:, :, pl.ds(start, 128)].astype(jnp.float32)
        if needs_mask:
            lane = lax.broadcasted_iota(jnp.int32, c.shape, dimension=2)
            global_lane = hw * hw_tile + g * 128 + lane
            c = jnp.where(global_lane < hw_total, c, 0.0)
        return c

    if n_chunks <= 32:
        # Static unroll; a few independent vreg accumulators restore ILP.
        vregs_per_chunk = max(1, (b_tile * C + 7) // 8)
        n_acc = max(1, min(4, 8 // vregs_per_chunk, n_chunks))
        parts = [load_chunk(g, g * 128) for g in range(n_acc)]
        for g in range(n_acc, n_chunks):
            i = g % n_acc
            parts[i] = parts[i] + load_chunk(g, g * 128)
        total = parts[0]
        for p in parts[1:]:
            total = total + p
        acc_ref[...] += total
    else:
        def body(g, carry):
            start = pl.multiple_of(g * 128, 128)
            return carry + load_chunk(g, start)
        zero = jnp.zeros((b_tile, C, 128), jnp.float32)
        acc_ref[...] += lax.fori_loop(0, n_chunks, body, zero, unroll=4)

    # --- epilogue: finish the mean, fc1 -> relu -> fc2 -> softmax(z / T).
    @pl.when(hw == pl.num_programs(1) - 1)
    def _epilogue():
        # Single 128-wide cross-lane reduce; scale by the true 1/(H*W)
        # (masked / never-read lanes contribute nothing to the sum).
        pooled = jnp.sum(acc_ref[...], axis=-1) * (1.0 / hw_total)   # (b_tile, C)

        h = jnp.dot(pooled, w1t_ref[...],
                    preferred_element_type=jnp.float32)              # (b_tile, hidden)
        h = jnp.maximum(h, 0.0)
        z = jnp.dot(h, w2t_ref[...],
                    preferred_element_type=jnp.float32)              # (b_tile, K)

        # Numerically stable softmax(z / temperature) with an EXACT divide
        # (once per B tile -> negligible; keeps rows summing to 1).
        z = z * inv_temp
        z = z - jnp.max(z, axis=-1, keepdims=True)
        e = jnp.exp(z)
        o_ref[:, 0, :] = (e / jnp.sum(e, axis=-1, keepdims=True)).astype(o_ref.dtype)


def attention2d_forward(x_nchw, w1, w2, temperature, *, b_tile=None, hw_tile=None):
    """x_nchw: (B, C, H, W); w1: (hidden, C); w2: (K, hidden). Returns (B, K)."""
    B, C, H, W = x_nchw.shape
    hidden, c_in = w1.shape
    K, hidden2 = w2.shape
    assert c_in == C and hidden2 == hidden
    HW = H * W

    # NCHW -> (B, C, HW): spatial reduction on the lane axis (free reshape).
    x_flat = x_nchw.reshape(B, C, HW)
    itemsize = x_flat.dtype.itemsize
    sub = {4: 8, 2: 16, 1: 32}.get(itemsize, 8)
    c_pad = _round_up(C, sub)                     # VMEM sublane padding of C

    # ---- per-generation VMEM budget (v7x has 64 MiB/TC, v5e/v6e 128 MiB) ----
    try:
        vmem_cap = int(pltpu.get_tpu_info().vmem_capacity_bytes)
    except Exception:
        vmem_cap = 64 * _MIB
    if vmem_cap >= 100 * _MIB:                    # v5e / v6e
        tile_budget, vmem_limit = 12 * _MIB, 64 * _MIB
    else:                                         # v7x
        tile_budget, vmem_limit = 8 * _MIB, 30 * _MIB

    # ---- B tiling: >= 2 programs on the "parallel" axis whenever B >= 2 ----
    if b_tile is None:
        b_tile = 8 if B >= 16 else max(1, (B + 1) // 2)
    # Huge-C guard: keep even a minimum 128-lane tile inside the budget.
    if b_tile * c_pad * 128 * itemsize > tile_budget:
        b_tile = max(1, tile_budget // (c_pad * 128 * itemsize))

    # ---- HW tiling: budget-sized (no hard cap), lane-aligned ---------------
    if hw_tile is None:
        max_lanes = (tile_budget // (b_tile * c_pad * itemsize)) // 128 * 128
        hw_tile = min(_round_up(HW, 128), max(128, max_lanes))
    assert hw_tile % 128 == 0 and hw_tile >= 128

    # No jnp.pad: ragged HW is masked in-kernel; ragged B lands in a partial
    # last block whose out-of-range output rows Pallas discards.
    grid = (pl.cdiv(B, b_tile), pl.cdiv(HW, hw_tile))

    # Pre-transpose the 1x1-conv weights once on the host (no in-kernel XLU).
    w1t = jnp.asarray(w1, jnp.float32).T          # (C, hidden)
    w2t = jnp.asarray(w2, jnp.float32).T          # (hidden, K)

    kernel = functools.partial(
        _attention2d_kernel,
        hw_total=HW,
        inv_temp=1.0 / float(temperature),
    )

    flops = B * C * HW + 2 * B * (C * hidden + hidden * K)
    bytes_accessed = (B * C * HW * itemsize
                      + (C * hidden + hidden * K) * 4
                      + B * K * 4)

    out = pl.pallas_call(
        kernel,
        out_shape=jax.ShapeDtypeStruct((B, 1, K), jnp.float32),
        grid=grid,
        in_specs=[
            pl.BlockSpec((b_tile, C, hw_tile), lambda bi, hi: (bi, 0, hi)),
            pl.BlockSpec((C, hidden), lambda bi, hi: (0, 0)),
            pl.BlockSpec((hidden, K), lambda bi, hi: (0, 0)),
        ],
        out_specs=pl.BlockSpec((b_tile, 1, K), lambda bi, hi: (bi, 0, 0)),
        scratch_shapes=[pltpu.VMEM((b_tile, C, 128), jnp.float32)],
        compiler_params=pltpu.CompilerParams(
            dimension_semantics=("parallel", "arbitrary"),
            vmem_limit_bytes=vmem_limit,
        ),
        cost_estimate=pl.CostEstimate(
            flops=flops,
            transcendentals=B * K,
            bytes_accessed=bytes_accessed,
        ),
    )(x_flat, w1t, w2t)

    return out[:, 0, :]


def _reference(x_nchw, w1, w2, temperature):
    pooled = jnp.mean(x_nchw.astype(jnp.float32), axis=(2, 3))
    h = jnp.maximum(pooled @ w1.T, 0.0)
    z = (h @ w2.T) / float(temperature)
    return jax.nn.softmax(z, axis=1)


def _make_params(key, in_planes, ratios, K):
    # kaiming_normal_(mode='fan_out', nonlinearity='relu') for 1x1 convs:
    # std = sqrt(2 / (out_channels * 1 * 1))
    hidden_planes = int(in_planes * ratios) if in_planes != 3 else K
    k1, k2 = jax.random.split(key)
    std1 = (2.0 / hidden_planes) ** 0.5
    std2 = (2.0 / K) ** 0.5
    w1 = std1 * jax.random.normal(k1, (hidden_planes, in_planes), dtype=jnp.float32)
    w2 = std2 * jax.random.normal(k2, (K, hidden_planes), dtype=jnp.float32)
    return w1, w2


def _check(out, ref, tag):
    assert out.shape == ref.shape, f"shape mismatch ({tag})"
    assert jnp.allclose(out, ref, atol=1e-3, rtol=1e-3), f"mismatch vs reference ({tag})"
    assert jnp.allclose(jnp.sum(out, axis=1), 1.0, atol=1e-3), \
        f"softmax rows must sum to 1 ({tag})"


if __name__ == "__main__":
    # Module hyperparameters (consistent with attention2d.__init__):
    in_planes = 4
    ratios = 4                  # hidden_planes = int(in_planes * ratios) = 16
    K = 4
    temperature = 31            # temperature % 3 == 1

    key = jax.random.PRNGKey(0)
    kx1, kx2, kx3, kw = jax.random.split(key, 4)
    w1, w2 = _make_params(kw, in_planes, ratios, K)

    # Test 1: small canonical shape (single HW tile, 2 parallel B programs).
    B, H, W = 2, 16, 16
    x = jax.random.normal(kx1, (B, in_planes, H, W), dtype=jnp.float32)
    out = jax.block_until_ready(attention2d_forward(x, w1, w2, temperature))
    _check(out, _reference(x, w1, w2, temperature), "test 1")

    # Test 2: multi-tile HW reduction + ragged HW mask + ragged B drop.
    B2, H2, W2 = 3, 20, 20      # HW = 400 -> 4 tiles of 128, last one masked
    x2 = jax.random.normal(kx2, (B2, in_planes, H2, W2), dtype=jnp.float32)
    out2 = jax.block_until_ready(
        attention2d_forward(x2, w1, w2, temperature, hw_tile=128))
    _check(out2, _reference(x2, w1, w2, temperature), "test 2")

    # Test 3: large single HW tile -> fori_loop chunk path + ragged-HW mask.
    B3, H3, W3 = 2, 72, 72      # HW = 5184 -> hw_tile 5248, 41 chunks
    x3 = jax.random.normal(kx3, (B3, in_planes, H3, W3), dtype=jnp.float32)
    out3 = jax.block_until_ready(attention2d_forward(x3, w1, w2, temperature))
    _check(out3, _reference(x3, w1, w2, temperature), "test 3")

    print("KERNEL_OK")
</pallas_src>

<mosaic_0001>
module attributes {stable_mosaic.version = 11 : i64} {
  func.func @_attention2d_kernel(%arg0: i32, %arg1: i32, %arg2: memref<1x4x256xf32, #tpu.memory_space<vmem>>, %arg3: memref<4x16xf32, #tpu.memory_space<vmem>>, %arg4: memref<16x4xf32, #tpu.memory_space<vmem>>, %arg5: memref<1x1x4xf32, #tpu.memory_space<vmem>>, %arg6: memref<1x4x128xf32, #tpu.memory_space<vmem>>) attributes {dimension_semantics = [#tpu.dimension_semantics<parallel>, #tpu.dimension_semantics<arbitrary>], iteration_bounds = array<i64: 2, 1>, scalar_prefetch = 0 : i64, scratch_operands = 1 : i64, tpu.core_type = #tpu.core_type<tc>, window_params = [{transform_indices = @transform_0, window_bounds = array<i64: 1, 4, 256>}, {pipeline_mode = #tpu.pipeline_mode<synchronous>, transform_indices = @transform_1, window_bounds = array<i64: 4, 16>}, {pipeline_mode = #tpu.pipeline_mode<synchronous>, transform_indices = @transform_2, window_bounds = array<i64: 16, 4>}, {transform_indices = @transform_3, window_bounds = array<i64: 1, 1, 4>}]} {
    %c0_i32 = arith.constant 0 : i32
    %0 = arith.cmpi eq, %arg1, %c0_i32 : i32
    %1 = arith.extui %0 : i1 to i32
    %c0_i32_0 = arith.constant 0 : i32
    %2 = arith.cmpi ne, %1, %c0_i32_0 : i32
    scf.if %2 {
      %cst = arith.constant 0.000000e+00 : f32
      %12 = vector.broadcast %cst : f32 to vector<1x4x128xf32>
      %c0_13 = arith.constant 0 : index
      %c0_14 = arith.constant 0 : index
      %c0_15 = arith.constant 0 : index
      %13 = vector.load %arg6[%c0_13, %c0_14, %c0_15] : memref<1x4x128xf32, #tpu.memory_space<vmem>>, vector<1x4x128xf32>
      tpu.vector_store %arg6[%c0_13, %c0_14, %c0_15], %12 {strides = array<i32>} : memref<1x4x128xf32, #tpu.memory_space<vmem>>, vector<1x4x128xf32>,
    } else {
    }
    %c0 = arith.constant 0 : index
    %c0_1 = arith.constant 0 : index
    %c0_2 = arith.constant 0 : index
    %3 = vector.load %arg2[%c0, %c0_1, %c0_2] : memref<1x4x256xf32, #tpu.memory_space<vmem>>, vector<1x4x128xf32>
    %c0_3 = arith.constant 0 : index
    %c0_4 = arith.constant 0 : index
    %c128 = arith.constant 128 : index
    %4 = vector.load %arg2[%c0_3, %c0_4, %c128] : memref<1x4x256xf32, #tpu.memory_space<vmem>>, vector<1x4x128xf32>
    %5 = arith.addf %3, %4 : vector<1x4x128xf32>
    %c0_5 = arith.constant 0 : index
    %c0_6 = arith.constant 0 : index
    %c0_7 = arith.constant 0 : index
    %6 = vector.load %arg6[%c0_5, %c0_6, %c0_7] : memref<1x4x128xf32, #tpu.memory_space<vmem>>, vector<1x4x128xf32>
    %7 = arith.addf %6, %5 : vector<1x4x128xf32>
    %c0_8 = arith.constant 0 : index
    %c0_9 = arith.constant 0 : index
    %c0_10 = arith.constant 0 : index
    %8 = vector.load %arg6[%c0_8, %c0_9, %c0_10] : memref<1x4x128xf32, #tpu.memory_space<vmem>>, vector<1x4x128xf32>
    tpu.vector_store %arg6[%c0_8, %c0_9, %c0_10], %7 {strides = array<i32>} : memref<1x4x128xf32, #tpu.memory_space<vmem>>, vector<1x4x128xf32>,
    %c0_i32_11 = arith.constant 0 : i32
    %9 = arith.cmpi eq, %arg1, %c0_i32_11 : i32
    %10 = arith.extui %9 : i1 to i32
    %c0_i32_12 = arith.constant 0 : i32
    %11 = arith.cmpi ne, %10, %c0_i32_12 : i32
    scf.if %11 {
      %c0_13 = arith.constant 0 : index
      %c0_14 = arith.constant 0 : index
      %c0_15 = arith.constant 0 : index
      %12 = vector.load %arg6[%c0_13, %c0_14, %c0_15] : memref<1x4x128xf32, #tpu.memory_space<vmem>>, vector<1x4x128xf32>
      %cst = arith.constant dense<0.000000e+00> : vector<1x4xf32>
      %13 = vector.multi_reduction <add>, %12, %cst [2] : vector<1x4x128xf32> to vector<1x4xf32>
      %cst_16 = arith.constant 3.906250e-03 : f32
      %14 = vector.broadcast %cst_16 : f32 to vector<1x4xf32>
      %15 = arith.mulf %13, %14 : vector<1x4xf32>
      %c0_17 = arith.constant 0 : index
      %c0_18 = arith.constant 0 : index
      %16 = vector.load %arg3[%c0_17, %c0_18] : memref<4x16xf32, #tpu.memory_space<vmem>>, vector<4x16xf32>
      %cst_19 = arith.constant dense<0.000000e+00> : vector<1x16xf32>
      %17 = tpu.matmul %15, %16, %cst_19 {dimension_numbers = #tpu.dot_dimension_numbers<[1], [0], [0], [1], [0, 0, 1, 1], [], []>} : vector<1x4xf32>, vector<4x16xf32>, vector<1x16xf32> -> vector<1x16xf32>
      %cst_20 = arith.constant 0.000000e+00 : f32
      %18 = vector.broadcast %cst_20 : f32 to vector<1x16xf32>
      %19 = arith.maximumf %17, %18 : vector<1x16xf32>
      %c0_21 = arith.constant 0 : index
      %c0_22 = arith.constant 0 : index
      %20 = vector.load %arg4[%c0_21, %c0_22] : memref<16x4xf32, #tpu.memory_space<vmem>>, vector<16x4xf32>
      %cst_23 = arith.constant dense<0.000000e+00> : vector<1x4xf32>
      %21 = tpu.matmul %19, %20, %cst_23 {dimension_numbers = #tpu.dot_dimension_numbers<[1], [0], [0], [1], [0, 0, 1, 1], [], []>} : vector<1x16xf32>, vector<16x4xf32>, vector<1x4xf32> -> vector<1x4xf32>
      %cst_24 = arith.constant 0.0322580636 : f32
      %22 = vector.broadcast %cst_24 : f32 to vector<1x4xf32>
      %23 = arith.mulf %21, %22 : vector<1x4xf32>
      %cst_25 = arith.constant dense<0xFF800000> : vector<1xf32>
      %24 = vector.multi_reduction <maximumf>, %23, %cst_25 [1] : vector<1x4xf32> to vector<1xf32>
      %25 = vector.shape_cast %24 : vector<1xf32> to vector<1x1xf32>
      %26 = vector.broadcast %25 : vector<1x1xf32> to vector<1x4xf32>
      %27 = arith.subf %23, %26 : vector<1x4xf32>
      %28 = math.exp %27 : vector<1x4xf32>
      %cst_26 = arith.constant dense<0.000000e+00> : vector<1xf32>
      %29 = vector.multi_reduction <add>, %28, %cst_26 [1] : vector<1x4xf32> to vector<1xf32>
      %30 = vector.shape_cast %29 : vector<1xf32> to vector<1x1xf32>
      %31 = vector.broadcast %30 : vector<1x1xf32> to vector<1x4xf32>
      %32 = arith.divf %28, %31 : vector<1x4xf32>
      %c0_27 = arith.constant 0 : index
      %c0_28 = arith.constant 0 : index
      %c0_29 = arith.constant 0 : index
      %33 = vector.load %arg5[%c0_27, %c0_28, %c0_29] : memref<1x1x4xf32, #tpu.memory_space<vmem>>, vector<1x1x4xf32>
      %34 = vector.shape_cast %33 : vector<1x1x4xf32> to vector<1x4xf32>
      %35 = vector.shape_cast %32 : vector<1x4xf32> to vector<1x1x4xf32>
      tpu.vector_store %arg5[%c0_27, %c0_28, %c0_29], %35 {strides = array<i32>} : memref<1x1x4xf32, #tpu.memory_space<vmem>>, vector<1x1x4xf32>,
    } else {
    }
    return
  }
  func.func @transform_0(%arg0: i32, %arg1: i32) -> (i32, i32, i32) {
    %c0_i32 = arith.constant 0 : i32
    %c0_i32_0 = arith.constant 0 : i32
    return %arg0, %c0_i32, %arg1 : i32, i32, i32
  }
  func.func @transform_1(%arg0: i32, %arg1: i32) -> (i32, i32) {
    %c0_i32 = arith.constant 0 : i32
    %c0_i32_0 = arith.constant 0 : i32
    %c0_i32_1 = arith.constant 0 : i32
    return %c0_i32, %c0_i32_0 : i32, i32
  }
  func.func @transform_2(%arg0: i32, %arg1: i32) -> (i32, i32) {
    %c0_i32 = arith.constant 0 : i32
    %c0_i32_0 = arith.constant 0 : i32
    %c0_i32_1 = arith.constant 0 : i32
    return %c0_i32, %c0_i32_0 : i32, i32
  }
  func.func @transform_3(%arg0: i32, %arg1: i32) -> (i32, i32, i32) {
    %c0_i32 = arith.constant 0 : i32
    %c0_i32_0 = arith.constant 0 : i32
    %c0_i32_1 = arith.constant 0 : i32
    return %arg0, %c0_i32, %c0_i32_0 : i32, i32, i32
  }
}

</mosaic_0001>

<llo_original>
// kernel: tpu_custom_call.1
$region0: #{tpu_custom_call.1}
  #allocation0 [shape = 'u32[]', space=smem, size = 0x4, offset = 0x4, fixed_abs, tag = 'smem constant byte address 0x4 - core index']
  #allocation1 [shape = 'u32[144,128]{1,0:T(1,128)}', space=vmem, size = 0x12000, scoped, tag = 'internal scratch']
  #allocation2 [shape = 'f32[1,4,128]{2,1,0:T(4,128)}', space=vmem, size = 0x800, scoped, tag = 'scratch operand']
  %s0 = inlined_call_operand.vmem [shape: f32[2,4,256], index: 0, kind: input, shape index: {}]
  %s1 = inlined_call_operand.vmem [shape: f32[4,16], index: 1, kind: input, shape index: {}]
  %s2 = inlined_call_operand.vmem [shape: f32[16,4], index: 2, kind: input, shape index: {}]
  %s3 = inlined_call_operand.hbm [shape: f32[2,1,4], index: 3, kind: output, shape index: {}]
  %s4 = sld [smem:[#allocation0]]
  $region53: #{tpu_custom_call.1} parent=0
    _
  %s6 = ssub.s32 1, %s4
  %s7 = scalar_select 0, %s6, %s4
  $region1: #{tpu_custom_call.1} parent=0
    #allocation3 [shape = 'u8[1024]{0}', space=vmem, size = 0x400, scoped, tag = 'output window, operand 0']
    #allocation4 [shape = 's32[2]{0}', space=sflag, size = 0x8, scoped, tag = 'scoped memory for tpu_custom_call.1']
    %8 = vsyncpa [#allocation4], 0
    %s9 = scalar_lea.sflag [#allocation4], 1
    %10 = vsyncpa %s9, 0
    loop: start=0, step=1, limit=4
    $region2: #{tpu_custom_call.1} parent=1 // loop_pre_header
      _
    $region3: #{tpu_custom_call.1} parent=1 // loop_header
      %s12 = sphi 0, %s16
      %p13 = scmp.ge.s32.totalorder %s12, 4
      %s19 = sphi 0, %s31
      %s20 = sphi 0, %s27
      %s21 = sphi 0, %s19
      %s22 = sphi 0, %s20
      %s23 = sphi 0, %s21
      %s24 = sphi 0, %s22
      %s36 = sphi 0, %s38
      %s39 = sphi 0, %s36
      %s40 = sphi 0, %s39
      %s56 = sphi 0, %s40
      %s60 = sphi 0, %s60
      %s62 = sphi 0, %s60
      %s63 = sphi 0, %s62
      %s77 = sphi 0, %s63
      %s81 = sphi 0, %s81
      %s83 = sphi 0, %s81
      %s84 = sphi 0, %s83
      %s98 = sphi 0, %s84
      %s104 = sphi 0, %s106
      %s107 = sphi 0, %s104
      %s108 = sphi 0, %s107
      %s124 = sphi 0, %s108
    $region4: #{tpu_custom_call.1} parent=1 // loop_header_branch
      %15 = sbr.rel (%p13) target = $region8
    $region5: #{tpu_custom_call.1} parent=1 // loop_body
      %s17 = ssub.s32 %s12, 1
      %s18 = ssub.s32 %s12, 2
      %s25 = sadd.s32 1, %s20
      %p26 = scmp.ge.s32.totalorder %s25, 1
      %s27 = scalar_select %p26, 0, %s25
      %s28 = sadd.s32 1, %s19
      %s29 = scalar_select %p26, %s28, %s19
      %p30 = scmp.ge.s32.totalorder %s29, 2
      %s31 = scalar_select %p30, 0, %s29
      %s32 = ssub.s32 %s19, %s31
      %s33 = ssub.s32 %s20, %s27
      %s34 = sor.u32 %s32, %s33
      %p35 = scmp.eq.s32.totalorder %s34, 0
      %s37 = sadd.s32 %s36, 1
      %s38 = scalar_select %p35, %s36, %s37
      %p41 = pneg %p35
      %p42 = scmp.eq.s32.totalorder %s12, 1
      %p43 = por %p41, %p42
      %p44 = scmp.ne.s32.totalorder %s36, %s39
      %p45 = scmp.eq.s32.totalorder %s12, 0
      %p46 = por %p44, %p45
      %p47 = scmp.ne.s32.totalorder %s36, %s39
      %p48 = scmp.eq.s32.totalorder %s17, 1
      %p49 = por %p47, %p48
      %p50 = scmp.ne.s32.totalorder %s39, %s40
      %p51 = scmp.eq.s32.totalorder %s17, 0
      %p52 = por %p50, %p51
      %p53 = scmp.ne.s32.totalorder %s39, %s40
      %p54 = scmp.eq.s32.totalorder %s18, 1
      %p55 = por %p53, %p54
      %p57 = scmp.ne.s32.totalorder %s40, %s56
      %p58 = scmp.eq.s32.totalorder %s18, 0
      %p59 = por %p57, %p58
      %s61 = sadd.s32 %s60, 1
      %p64 = scmp.eq.s32.totalorder %s12, 1
      %p65 = scmp.ne.s32.totalorder %s60, %s62
      %p66 = scmp.eq.s32.totalorder %s12, 0
      %p67 = por %p65, %p66
      %p68 = scmp.ne.s32.totalorder %s60, %s62
      %p69 = scmp.eq.s32.totalorder %s17, 1
      %p70 = por %p68, %p69
      %p71 = scmp.ne.s32.totalorder %s62, %s63
      %p72 = scmp.eq.s32.totalorder %s17, 0
      %p73 = por %p71, %p72
      %p74 = scmp.ne.s32.totalorder %s62, %s63
      %p75 = scmp.eq.s32.totalorder %s18, 1
      %p76 = por %p74, %p75
      %p78 = scmp.ne.s32.totalorder %s63, %s77
      %p79 = scmp.eq.s32.totalorder %s18, 0
      %p80 = por %p78, %p79
      %s82 = sadd.s32 %s81, 1
      %p85 = scmp.eq.s32.totalorder %s12, 1
      %p86 = scmp.ne.s32.totalorder %s81, %s83
      %p87 = scmp.eq.s32.totalorder %s12, 0
      %p88 = por %p86, %p87
      %p89 = scmp.ne.s32.totalorder %s81, %s83
      %p90 = scmp.eq.s32.totalorder %s17, 1
      %p91 = por %p89, %p90
      %p92 = scmp.ne.s32.totalorder %s83, %s84
      %p93 = scmp.eq.s32.totalorder %s17, 0
      %p94 = por %p92, %p93
      %p95 = scmp.ne.s32.totalorder %s83, %s84
      %p96 = scmp.eq.s32.totalorder %s18, 1
      %p97 = por %p95, %p96
      %p99 = scmp.ne.s32.totalorder %s84, %s98
      %p100 = scmp.eq.s32.totalorder %s18, 0
      %p101 = por %p99, %p100
      %s102 = ssub.s32 %s19, %s31
      %p103 = scmp.eq.s32.totalorder %s102, 0
      %s105 = sadd.s32 %s104, 1
      %s106 = scalar_select %p103, %s104, %s105
      %p109 = pneg %p103
      %p110 = scmp.eq.s32.totalorder %s12, 1
      %p111 = por %p109, %p110
      %p112 = scmp.ne.s32.totalorder %s104, %s107
      %p113 = scmp.eq.s32.totalorder %s12, 0
      %p114 = por %p112, %p113
      %p115 = scmp.ne.s32.totalorder %s104, %s107
      %p116 = scmp.eq.s32.totalorder %s17, 1
      %p117 = por %p115, %p116
      %p118 = scmp.ne.s32.totalorder %s107, %s108
      %p119 = scmp.eq.s32.totalorder %s17, 0
      %p120 = por %p118, %p119
      %p121 = scmp.ne.s32.totalorder %s107, %s108
      %p122 = scmp.eq.s32.totalorder %s18, 1
      %p123 = por %p121, %p122
      %p125 = scmp.ne.s32.totalorder %s108, %s124
      %p126 = scmp.eq.s32.totalorder %s18, 0
      %p127 = por %p125, %p126
      %p128 = scmp.le.s32.totalorder 1, %s12
      %p129 = scmp.lt.s32.totalorder %s12, 3
      %p130 = pnand %p128, %p129
      %p131 = pneg %p130
      // Predicated region
      $region9: #{tpu_custom_call.1} parent=5 // pred_check
        _
      $region10: #{tpu_custom_call.1} parent=5 // pred_check_branch
        %133 = sbr.rel (%p130) target = $region12
      $region11: #{tpu_custom_call.1} parent=5 // pred_region
        %s134 = ssub.s32 %s12, 1
        // Predicated region
        $region13: #{tpu_custom_call.1} parent=11 // pred_check
          %p135 = pneg %p73
        $region14: #{tpu_custom_call.1} parent=11 // pred_check_branch
          %137 = sbr.rel (%p135) target = $region16
        $region15: #{tpu_custom_call.1} parent=11 // pred_region
          _
        $region16: #{tpu_custom_call.1} parent=11 // pred_fallthru
          _
        // Predicated region
        $region17: #{tpu_custom_call.1} parent=11 // pred_check
          %p138 = pneg %p94
        $region18: #{tpu_custom_call.1} parent=11 // pred_check_branch
          %140 = sbr.rel (%p138) target = $region20
        $region19: #{tpu_custom_call.1} parent=11 // pred_region
          _
        $region20: #{tpu_custom_call.1} parent=11 // pred_fallthru
          _
      $region12: #{tpu_custom_call.1} parent=5 // pred_fallthru
        _
      %p141 = scmp.lt.s32.totalorder %s12, 2
      // Predicated region
      $region21: #{tpu_custom_call.1} parent=5 // pred_check
        %p142 = pneg %p141
      $region22: #{tpu_custom_call.1} parent=5 // pred_check_branch
        %144 = sbr.rel (%p142) target = $region24
      $region23: #{tpu_custom_call.1} parent=5 // pred_region
        // Predicated region
        $region25: #{tpu_custom_call.1} parent=23 // pred_check
          %p145 = pneg %p46
        $region26: #{tpu_custom_call.1} parent=23 // pred_check_branch
          %147 = sbr.rel (%p145) target = $region28
        $region27: #{tpu_custom_call.1} parent=23 // pred_region
          %s148 = smul.u32 2, %s20
          %p149 = scmp.lt.s32.totalorder %s19, 1
          %s150 = scalar_select %p149, %s19, 1
          %p151 = scmp.lt.s32.totalorder %s148, 1
          %s152 = scalar_select %p151, %s148, 1
          %s153 = smul.addr %s150, 2
          %s154 = sadd.s32 %s152, %s153
          %s155 = smul.addr %s154, 4
          %s156 = scalar_lea.vmem %s0, %s155
          %s157 = smul.u32 2, %s20
        $region28: #{tpu_custom_call.1} parent=23 // pred_fallthru
          _
      $region24: #{tpu_custom_call.1} parent=5 // pred_fallthru
        _
      %p158 = scmp.le.s32.totalorder 1, %s12
      %p159 = scmp.lt.s32.totalorder %s12, 3
      %p160 = pnand %p158, %p159
      %p161 = pneg %p160
      // Predicated region
      $region29: #{tpu_custom_call.1} parent=5 // pred_check
        _
      $region30: #{tpu_custom_call.1} parent=5 // pred_check_branch
        %163 = sbr.rel (%p160) target = $region32
      $region31: #{tpu_custom_call.1} parent=5 // pred_region
        %s164 = ssub.s32 %s12, 1
        %s165 = smul.u32 2, %s22
        %p166 = scmp.lt.s32.totalorder %s21, 1
        %s167 = scalar_select %p166, %s21, 1
        %p168 = scmp.lt.s32.totalorder %s165, 1
        %s169 = scalar_select %p168, %s165, 1
        %s170 = smul.addr %s167, 2
        %s171 = sadd.s32 %s169, %s170
        %s172 = smul.addr %s171, 4
        %s173 = scalar_lea.vmem %s0, %s172
        %p174 = pneg %p52
        %p175 = pneg %p49
        %p176 = pneg %p73
        %p177 = pneg %p70
        %p178 = pneg %p94
        %p179 = pneg %p91
        %p180 = pneg %p120
        %p181 = pneg %p117
        %s182 = sand.u32 %s107, 1
        %s183 = scalar_lea.sflag [#allocation4], %s182
        %s184 = sand.u32 %s107, 1
        %s185 = scalar_lea.vmem [#allocation3], %s184
        %s186 = smul.u32 2, %s22
        %p187 = scmp.lt.s32.totalorder %s21, 1
        %s188 = scalar_select %p187, %s21, 1
        %p189 = scmp.lt.s32.totalorder %s186, 1
        %s190 = scalar_select %p189, %s186, 1
        %s191 = smul.addr %s188, 2
        %s192 = sadd.s32 %s190, %s191
        %s193 = smul.addr %s192, 4
        %s194 = scalar_lea.vmem %s0, %s193
        %s195 = smul.u32 2, %s22
        %p196 = scmp.eq.s32.totalorder %s22, 0
        // Predicated region
        $region33: #{tpu_custom_call.1} parent=31 // pred_check
          %p197 = pneg %p196
        $region34: #{tpu_custom_call.1} parent=31 // pred_check_branch
          %199 = sbr.rel (%p197) target = $region36
        $region35: #{tpu_custom_call.1} parent=31 // pred_region
          %200 = vst [vmem:[#allocation2] sm:$0xf] 0.0
        $region36: #{tpu_custom_call.1} parent=31 // pred_fallthru
          _
        %v201 = vld [vmem:[%s194] sm:$0xf]
        %v202 = vld [vmem:[%s194 + $0x4] sm:$0xf]
        %v203 = vadd.f32 %v201, %v202
        %v204 = vld [vmem:[#allocation2] sm:$0xf]
        %v205 = vadd.f32 %v204, %v203
        %206 = vst [vmem:[#allocation2] sm:$0xf] %v205
        // Predicated region
        $region37: #{tpu_custom_call.1} parent=31 // pred_check
          %p207 = pneg %p196
        $region38: #{tpu_custom_call.1} parent=31 // pred_check_branch
          %209 = sbr.rel (%p207) target = $region40
        $region39: #{tpu_custom_call.1} parent=31 // pred_region
          %v210 = vld [vmem:[#allocation2] sm:$0xf]
          %vm211 = vcmask 1043456
          %v212 = vsel %vm211, %v210, 0.0
          %213 = vadd.xlane.f32.xlu0 %v212
          %v214 = vpop.xlane.xlu0 %213
          %v215 = vmul.f32 %v214, 0.00390625
          %v216 = vld [vmem:[%s1] sm:$0xf]
          %v218 = vlaneseq
          %v219 = vand.u32 %v218, 127
          %v220 = vlaneseq
          %v221 = vshrl.u32 %v220, 7
          %v222 = vsub.s32 %v219, %v221
          %v223 = vrot.slane %v215, %v222
          %vm224 = vcmask 31744
          %v225 = vsel %vm224, %v223, 0
          %v228 = vsel %vm211, %v216, 0
          %230 = vmatprep.subr.mxu0 0.0
          %231 = vmatpush1.msra.mxu0 0.0
          %232 = vmatprep.subr.mxu0 0.0
          %233 = vmatpush1.msra.mxu0 0.0
          %234 = vmatprep.subr.mxu0 0.0
          %235 = vmatpush1.msra.mxu0 0.0
          %236 = vmatprep.subr.mxu0 0.0
          %237 = vmatpush1.msra.mxu0 0.0
          %238 = vmatprep.subr.mxu0 0.0
          %239 = vmatpush1.msra.mxu0 0.0
          %240 = vmatprep.subr.mxu0 0.0
          %241 = vmatpush1.msra.mxu0 0.0
          %242 = vmatprep.subr.mxu0 0.0
          %243 = vmatpush1.msra.mxu0 0.0
          %244 = vmatprep.subr.mxu0 0.0
          %245 = vmatpush1.msra.mxu0 0.0
          %246 = vmatprep.subr.mxu0 0.0
          %247 = vmatpush1.msra.mxu0 0.0
          %248 = vmatprep.subr.mxu0 0.0
          %249 = vmatpush1.msra.mxu0 0.0
          %250 = vmatprep.subr.mxu0 0.0
          %251 = vmatpush1.msra.mxu0 0.0
          %252 = vmatprep.subr.mxu0 0.0
          %253 = vmatpush1.msra.mxu0 0.0
          %254 = vmatprep.subr.mxu0 0.0
          %255 = vmatpush1.msra.mxu0 0.0
          %256 = vmatprep.subr.mxu0 0.0
          %257 = vmatpush1.msra.mxu0 0.0
          %258 = vmatprep.subr.mxu0 0.0
          %259 = vmatpush1.msra.mxu0 0.0
          %260 = vmatprep.subr.mxu0 0.0
          %261 = vmatpush1.msra.mxu0 %v228
          %262 = vmatprep.subr.mxu0 0.0
          %263 = vmatpush2.msra.mxu0 0.0
          %264 = vmatprep.subr.mxu0 0.0
          %265 = vmatpush2.msra.mxu0 0.0
          %266 = vmatprep.subr.mxu0 0.0
          %267 = vmatpush2.msra.mxu0 0.0
          %268 = vmatprep.subr.mxu0 0.0
          %269 = vmatpush2.msra.mxu0 0.0
          %270 = vmatprep.subr.mxu0 0.0
          %271 = vmatpush2.msra.mxu0 0.0
          %272 = vmatprep.subr.mxu0 0.0
          %273 = vmatpush2.msra.mxu0 0.0
          %274 = vmatprep.subr.mxu0 0.0
          %275 = vmatpush2.msra.mxu0 0.0
          %276 = vmatprep.subr.mxu0 0.0
          %277 = vmatpush2.msra.mxu0 0.0
          %278 = vmatprep.subr.mxu0 0.0
          %279 = vmatpush2.msra.mxu0 0.0
          %280 = vmatprep.subr.mxu0 0.0
          %281 = vmatpush2.msra.mxu0 0.0
          %282 = vmatprep.subr.mxu0 0.0
          %283 = vmatpush2.msra.mxu0 0.0
          %284 = vmatprep.subr.mxu0 0.0
          %285 = vmatpush2.msra.mxu0 0.0
          %286 = vmatprep.subr.mxu0 0.0
          %287 = vmatpush2.msra.mxu0 0.0
          %288 = vmatprep.subr.mxu0 0.0
          %289 = vmatpush2.msra.mxu0 0.0
          %290 = vmatprep.subr.mxu0 0.0
          %291 = vmatpush2.msra.mxu0 0.0
          %292 = vmatprep.subr.mxu0 0.0
          %293 = vmatpush2.msra.mxu0 0.0
          %294 = vmatprep.mubr.f32.mxu0 0.0
          %295 = vmatmul.mubr.f32.gmra.mxu0 %v225
          %v296 = vpop.f32.mrf.mxu0
          %v297 = vadd.f32 0.0, %v296
          %v298 = vpop.f32.mrf.mxu0
          %299 = vdwg.mxu0
          %v300 = vmax.f32 %v297, 0.0
          %v301 = vld [vmem:[%s2] sm:$0xff]
          %v302 = vld [vmem:[%s2 + $0x8] sm:$0xff]
          %vm303 = vcmask 130048
          %v305 = vsel %vm303, %v300, 0
          %307 = vmatprep.subr.mxu0 0.0
          %308 = vmatpush1.msra.mxu0 0.0
          %309 = vmatprep.subr.mxu0 0.0
          %310 = vmatpush1.msra.mxu0 0.0
          %311 = vmatprep.subr.mxu0 0.0
          %312 = vmatpush1.msra.mxu0 0.0
          %313 = vmatprep.subr.mxu0 0.0
          %314 = vmatpush1.msra.mxu0 0.0
          %315 = vmatprep.subr.mxu0 0.0
          %316 = vmatpush1.msra.mxu0 0.0
          %317 = vmatprep.subr.mxu0 0.0
          %318 = vmatpush1.msra.mxu0 0.0
          %319 = vmatprep.subr.mxu0 0.0
          %320 = vmatpush1.msra.mxu0 0.0
          %321 = vmatprep.subr.mxu0 0.0
          %322 = vmatpush1.msra.mxu0 0.0
          %323 = vmatprep.subr.mxu0 0.0
          %324 = vmatpush1.msra.mxu0 0.0
          %325 = vmatprep.subr.mxu0 0.0
          %326 = vmatpush1.msra.mxu0 0.0
          %327 = vmatprep.subr.mxu0 0.0
          %328 = vmatpush1.msra.mxu0 0.0
          %329 = vmatprep.subr.mxu0 0.0
          %330 = vmatpush1.msra.mxu0 0.0
          %331 = vmatprep.subr.mxu0 0.0
          %332 = vmatpush1.msra.mxu0 0.0
          %333 = vmatprep.subr.mxu0 0.0
          %334 = vmatpush1.msra.mxu0 0.0
          %335 = vmatprep.subr.mxu0 0.0
          %336 = vmatpush1.msra.mxu0 %v302
          %337 = vmatprep.subr.mxu0 0.0
          %338 = vmatpush1.msra.mxu0 %v301
          %339 = vmatprep.subr.mxu0 0.0
          %340 = vmatpush2.msra.mxu0 0.0
          %341 = vmatprep.subr.mxu0 0.0
          %342 = vmatpush2.msra.mxu0 0.0
          %343 = vmatprep.subr.mxu0 0.0
          %344 = vmatpush2.msra.mxu0 0.0
          %345 = vmatprep.subr.mxu0 0.0
          %346 = vmatpush2.msra.mxu0 0.0
          %347 = vmatprep.subr.mxu0 0.0
          %348 = vmatpush2.msra.mxu0 0.0
          %349 = vmatprep.subr.mxu0 0.0
          %350 = vmatpush2.msra.mxu0 0.0
          %351 = vmatprep.subr.mxu0 0.0
          %352 = vmatpush2.msra.mxu0 0.0
          %353 = vmatprep.subr.mxu0 0.0
          %354 = vmatpush2.msra.mxu0 0.0
          %355 = vmatprep.subr.mxu0 0.0
          %356 = vmatpush2.msra.mxu0 0.0
          %357 = vmatprep.subr.mxu0 0.0
          %358 = vmatpush2.msra.mxu0 0.0
          %359 = vmatprep.subr.mxu0 0.0
          %360 = vmatpush2.msra.mxu0 0.0
          %361 = vmatprep.subr.mxu0 0.0
          %362 = vmatpush2.msra.mxu0 0.0
          %363 = vmatprep.subr.mxu0 0.0
          %364 = vmatpush2.msra.mxu0 0.0
          %365 = vmatprep.subr.mxu0 0.0
          %366 = vmatpush2.msra.mxu0 0.0
          %367 = vmatprep.subr.mxu0 0.0
          %368 = vmatpush2.msra.mxu0 0.0
          %369 = vmatprep.subr.mxu0 0.0
          %370 = vmatpush2.msra.mxu0 0.0
          %371 = vmatprep.mubr.f32.mxu0 0.0
          %372 = vmatmul.mubr.f32.gmra.mxu0 %v305
          %v373 = vpop.f32.mrf.mxu0
          %v374 = vadd.f32 0.0, %v373
          %v375 = vpop.f32.mrf.mxu0
          %376 = vdwg.mxu0
          %v377 = vmul.f32 %v374, 0.032258064
          %vm378 = vcmask 24576
          %v379 = vsel %vm378, %v377, -inf
          %380 = vmax.xlane.f32.xlu0 %v379
          %v381 = vpop.xlane.xlu0 %380
          %v382 = vsub.f32 %v377, %v381
          %v383 = vmul.f32 %v382, 1.442695
          %v384 = vpow.pop %v383
          %v385 = vsel %vm378, %v384, 0.0
          %386 = vadd.xlane.f32.xlu0 %v385
          %v387 = vpop.xlane.xlu0 %386
          %v388 = vrcp.pop %v387
          %v389 = vmul.f32 %v384, %v388
          %390 = vst.msk [vmem:[%s185] sm:$0x1] %vm378, %v389
        $region40: #{tpu_custom_call.1} parent=31 // pred_fallthru
          _
        %s391 = sand.u32 %s107, 1
        %s392 = scalar_lea.sflag [#allocation4], %s391
        %s393 = sand.u32 %s107, 1
        %s394 = scalar_lea.vmem [#allocation3], %s393
        // Predicated region
        $region41: #{tpu_custom_call.1} parent=31 // pred_check
          %p395 = pneg %p117
        $region42: #{tpu_custom_call.1} parent=31 // pred_check_branch
          %397 = sbr.rel (%p395) target = $region44
        $region43: #{tpu_custom_call.1} parent=31 // pred_region
          %s399 = ssub.s32 16, 16
          %400 = vsyncadd %s392, %s399
          %s401 = smul.addr %s21, 16
          %s402 = scalar_lea.hbm %s3, %s401
          %s404 = sshll.u32 %s394, 4
          %s405 = int_to_ptr.vmem [resolvable:$true] %s404
          %407 = dma.vmem_to_hbm [thread:$0]  %s405, 16, %s402, %s392
        $region44: #{tpu_custom_call.1} parent=31 // pred_fallthru
          _
      $region32: #{tpu_custom_call.1} parent=5 // pred_fallthru
        _
      %p408 = scmp.le.s32.totalorder 2, %s12
      // Predicated region
      $region45: #{tpu_custom_call.1} parent=5 // pred_check
        %p409 = pneg %p408
      $region46: #{tpu_custom_call.1} parent=5 // pred_check_branch
        %411 = sbr.rel (%p409) target = $region48
      $region47: #{tpu_custom_call.1} parent=5 // pred_region
        %s412 = ssub.s32 %s12, 2
        // Predicated region
        $region49: #{tpu_custom_call.1} parent=47 // pred_check
          %p413 = pneg %p123
        $region50: #{tpu_custom_call.1} parent=47 // pred_check_branch
          %415 = sbr.rel (%p413) target = $region52
        $region51: #{tpu_custom_call.1} parent=47 // pred_region
          %s416 = sand.u32 %s108, 1
          %s417 = scalar_lea.sflag [#allocation4], %s416
          %s418 = sand.u32 %s108, 1
          %s419 = scalar_lea.vmem [#allocation3], %s418
          %420 = dma.done %s417, 16
        $region52: #{tpu_custom_call.1} parent=47 // pred_fallthru
          _
      $region48: #{tpu_custom_call.1} parent=5 // pred_fallthru
        _
    $region6: #{tpu_custom_call.1} parent=1 // loop_footer
      %s16 = sadd.s32 1, %s12
    $region7: #{tpu_custom_call.1} parent=1 // loop_footer_branch
      %11 = sbr.rel target = $region3
    $region8: #{tpu_custom_call.1} parent=1 // loop_exit
      _
    %421 = vsyncpa [#allocation4], 1
    %s422 = scalar_lea.sflag [#allocation4], 1
    %423 = vsyncpa %s422, 1

</llo_original>
